<compile_context>
chip_gen: v7x
topology: tpu7x:2x2x1
jax: 0.10.0
libtpu: 0.0.40
codegen_flags: <defaults>
</compile_context>

<pallas_src>
import math

import jax
import jax.numpy as jnp
import numpy as np
from jax.experimental import pallas as pl
from jax.experimental.pallas import tpu as pltpu

BN_EPS = 1e-5
SEQ_LEN = 104  # fixed by nn.Linear(104, output_size) in the PyTorch module


# --------------------------------------------------------------------------
# Kernel
# --------------------------------------------------------------------------
def cnn_kernel(x_ref, w_eff_ref, wfc_ref, bcomb_ref, out_ref):
    # x_ref      : (T, TB*C)   lane-dense batch tile of the (T, B*C) input
    # w_eff_ref  : (C, O_pad)  folded conv/bn chain weight, lane-broadcast
    # wfc_ref    : (T, O_pad)  fc1 weight, zero-padded to 128 lanes
    # bcomb_ref  : (1, O_pad)  folded bias (fc1 bias + conv-chain bias term)
    # out_ref    : (TB, O_pad)
    tb = out_ref.shape[0]
    c_in = w_eff_ref.shape[0]

    x = x_ref[...]                                              # (T, TB*C) f32

    # fc1 first, on the MXU: contract the (always fully in-bounds) T axis of
    # the input block against the T axis of the padded fc1 weight.  Output is
    # lane-dense (O_pad = 128 lanes) with batch*channel rows on sublanes.
    y = jax.lax.dot_general(
        x, wfc_ref[...],
        dimension_numbers=(((0,), (0,)), ((), ())),
        preferred_element_type=jnp.float32)                     # (TB*C, O_pad)

    # Folded conv1->bn1->conv2->bn2->conv3 weight applied as a weighted sum
    # over the C adjacent rows belonging to each batch element (a cheap
    # in-vreg sublane-group reduce; the reshape is a layout no-op since the
    # group size equals the native sublane count for C=8).
    y = y.reshape(tb, c_in, y.shape[-1])                        # (TB, C, O_pad)
    h = jnp.sum(y * w_eff_ref[...][None, :, :], axis=1)         # (TB, O_pad)

    # dropout1: eval-mode identity.
    # TODO(synk): training-mode dropout (p=0.1, RNG, 1/(1-p) scaling) and
    # training-mode BatchNorm (batch statistics) are not implemented.
    out_ref[...] = (h + bcomb_ref[...]).astype(out_ref.dtype)


# --------------------------------------------------------------------------
# Trace-time parameter folding (exact in eval mode)
# --------------------------------------------------------------------------
def _fold_params(p, out_pad):
    """Fold conv1/bn1/conv2/bn2/conv3 into (w_eff, b_eff); fold b_eff into fc1."""
    s1 = p['g1'] * jax.lax.rsqrt(p['v1'] + BN_EPS)              # (64,)
    s2 = p['g2'] * jax.lax.rsqrt(p['v2'] + BN_EPS)              # (16,)

    # y = x @ A + c, composed layer by layer.
    A = p['w1'] * s1[None, :]                                   # (C_in, 64)
    c = p['b1'] * s1 + (p['be1'] - p['m1'] * s1)                # (64,)
    A = A @ p['w2']                                             # (C_in, 16)
    c = c @ p['w2'] + p['b2']                                   # (16,)
    A = A * s2[None, :]
    c = c * s2 + (p['be2'] - p['m2'] * s2)
    A = A @ p['w3']                                             # (C_in, 1)
    c = c @ p['w3'] + p['b3']                                   # (1,)

    # Lane-broadcast folded weight: (C_in, O_pad), constant along lanes.
    w_eff = jnp.broadcast_to(A.astype(jnp.float32), (A.shape[0], out_pad))
    b_eff = c[0]                                                # scalar

    T, O = p['wfc'].shape
    wfc_pad = jnp.zeros((T, out_pad), jnp.float32).at[:, :O].set(p['wfc'])
    # out = h3_raw^T @ wfc + (b_eff * sum_t wfc[t, :] + bfc)
    b_comb = b_eff * jnp.sum(p['wfc'], axis=0) + p['bfc']       # (O,)
    b_pad = jnp.zeros((1, out_pad), jnp.float32).at[0, :O].set(b_comb)
    return w_eff, wfc_pad, b_pad


# --------------------------------------------------------------------------
# Tile selection
# --------------------------------------------------------------------------
def _round_up(x, m):
    return ((x + m - 1) // m) * m


def _choose_tile(B, C, max_block_b):
    """Pick a batch tile: lane-dense (tb*C % 128 == 0), a small even number of
    grid steps (>=2 for v7x core parallelism), minimal ragged-tail waste."""
    lane_mult = 128 // math.gcd(C, 128)          # tb granularity for lane-density
    cap = max(max_block_b, lane_mult)
    if B <= max(2 * lane_mult, 32):
        return B                                  # single full-batch block (legal: block == array dims)
    n_steps = 2
    while True:
        tb = _round_up(pl.cdiv(B, n_steps), lane_mult)
        if tb <= cap:
            return tb
        n_steps += 2


# --------------------------------------------------------------------------
# Wrapper
# --------------------------------------------------------------------------
def cnn_forward(inputs, p, *, max_block_b=512):
    """inputs: (T, B, C_in) float32, matching the PyTorch forward signature.

    max_block_b=512 keeps every buffer well inside the 16 MiB v5e scoped-VMEM
    default (~1.7 MiB per input buffer); on v6e it can be raised to 1024-2048.
    """
    T, B, C = inputs.shape
    assert T == SEQ_LEN, "fc1 requires T == 104"
    O = p['wfc'].shape[1]
    out_pad = max(128, ((O + 127) // 128) * 128)                # lane-dense output

    w_eff, wfc_pad, b_pad = _fold_params(p, out_pad)

    # Free, contiguous reshape: lane axis becomes B*C (dense), not C=8.
    x2 = inputs.reshape(T, B * C).astype(jnp.float32)

    tb = _choose_tile(B, C, max_block_b)
    grid_len = pl.cdiv(B, tb)

    # Deepen the input pipeline only when there are enough grid steps for a
    # third buffer to matter (per-step compute is one short-K matmul).
    in0_kwargs = {}
    if grid_len >= 3:
        in0_kwargs["pipeline_mode"] = pl.Buffered(3)

    cost = pl.CostEstimate(
        flops=2 * B * C * T * out_pad + 2 * B * C * out_pad,
        transcendentals=0,
        bytes_accessed=4 * (T * B * C + B * out_pad + T * out_pad
                            + C * out_pad + out_pad),
    )

    out = pl.pallas_call(
        cnn_kernel,
        out_shape=jax.ShapeDtypeStruct((B, out_pad), jnp.float32),
        grid_spec=pltpu.PrefetchScalarGridSpec(
            num_scalar_prefetch=0,
            grid=(grid_len,),
            in_specs=[
                pl.BlockSpec((T, tb * C), lambda b: (0, b), **in0_kwargs),
                pl.BlockSpec(w_eff.shape, lambda b: (0, 0)),
                pl.BlockSpec(wfc_pad.shape, lambda b: (0, 0)),
                pl.BlockSpec(b_pad.shape, lambda b: (0, 0)),
            ],
            out_specs=pl.BlockSpec((tb, out_pad), lambda b: (b, 0)),
        ),
        compiler_params=pltpu.CompilerParams(
            dimension_semantics=("parallel",)),
        cost_estimate=cost,
    )(x2, w_eff, wfc_pad, b_pad)

    return out[:, :O]


# --------------------------------------------------------------------------
# Pure-JAX reference (layer by layer, eval-mode semantics)
# --------------------------------------------------------------------------
def cnn_reference(inputs, p):
    x = jnp.transpose(inputs, (1, 0, 2))                        # (B, T, C_in)
    h = x @ p['w1'] + p['b1']
    h = (h - p['m1']) * (p['g1'] / jnp.sqrt(p['v1'] + BN_EPS)) + p['be1']
    h = h @ p['w2'] + p['b2']
    h = (h - p['m2']) * (p['g2'] / jnp.sqrt(p['v2'] + BN_EPS)) + p['be2']
    h3 = (h @ p['w3'])[..., 0] + p['b3'][0]                     # (B, T)
    return h3 @ p['wfc'] + p['bfc']


# --------------------------------------------------------------------------
# Synthetic parameters (shapes follow the PyTorch module)
# --------------------------------------------------------------------------
def init_params(key, input_size, output_size):
    ks = jax.random.split(key, 16)

    def uni(k, shape, fan_in):
        bound = 1.0 / np.sqrt(fan_in)
        return jax.random.uniform(k, shape, jnp.float32, -bound, bound)

    return dict(
        # conv1: PyTorch weight (64, C_in, 1) stored as (C_in, 64)
        w1=uni(ks[0], (input_size, 64), input_size),
        b1=uni(ks[1], (64,), input_size),
        g1=1.0 + 0.1 * jax.random.normal(ks[2], (64,), jnp.float32),
        be1=0.1 * jax.random.normal(ks[3], (64,), jnp.float32),
        m1=0.1 * jax.random.normal(ks[4], (64,), jnp.float32),
        v1=jnp.abs(jax.random.normal(ks[5], (64,), jnp.float32)) + 0.5,
        # conv2: PyTorch (16, 64, 1) stored as (64, 16)
        w2=uni(ks[6], (64, 16), 64),
        b2=uni(ks[7], (16,), 64),
        g2=1.0 + 0.1 * jax.random.normal(ks[8], (16,), jnp.float32),
        be2=0.1 * jax.random.normal(ks[9], (16,), jnp.float32),
        m2=0.1 * jax.random.normal(ks[10], (16,), jnp.float32),
        v2=jnp.abs(jax.random.normal(ks[11], (16,), jnp.float32)) + 0.5,
        # conv3: PyTorch (1, 16, 1) stored as (16, 1)
        w3=uni(ks[12], (16, 1), 16),
        b3=uni(ks[13], (1,), 16),
        # fc1: PyTorch weight (out, 104) stored as (104, out)
        wfc=uni(ks[14], (SEQ_LEN, output_size), SEQ_LEN),
        bfc=uni(ks[15], (output_size,), SEQ_LEN),
    )


if __name__ == "__main__":
    key = jax.random.PRNGKey(0)
    k_in, k_in2, k_par = jax.random.split(key, 3)

    input_size = 8       # C_in
    output_size = 10
    T = SEQ_LEN          # must be 104 for fc1

    params = init_params(k_par, input_size, output_size)

    # Small demo shape (single grid step, whole batch resident).
    B = 2
    inputs = jax.random.normal(k_in, (T, B, input_size), jnp.float32)
    out = jax.block_until_ready(cnn_forward(inputs, params))
    ref = jax.block_until_ready(cnn_reference(inputs, params))
    np.testing.assert_allclose(np.asarray(out), np.asarray(ref),
                               rtol=1e-4, atol=1e-4)
    assert out.shape == (B, output_size)

    # Larger batch exercising the tiled, pipelined grid path (2 balanced
    # lane-dense tiles of 272 rows; ragged rows only touch dropped outputs).
    B2 = 520
    inputs2 = jax.random.normal(k_in2, (T, B2, input_size), jnp.float32)
    out2 = jax.block_until_ready(cnn_forward(inputs2, params))
    ref2 = jax.block_until_ready(cnn_reference(inputs2, params))
    np.testing.assert_allclose(np.asarray(out2), np.asarray(ref2),
                               rtol=1e-4, atol=1e-4)
    assert out2.shape == (B2, output_size)

    print("KERNEL_OK")
</pallas_src>

<mosaic_0001>
module attributes {stable_mosaic.version = 11 : i64} {
  func.func @cnn_kernel(%arg0: i32, %arg1: memref<104x16xf32, #tpu.memory_space<vmem>>, %arg2: memref<8x128xf32, #tpu.memory_space<vmem>>, %arg3: memref<104x128xf32, #tpu.memory_space<vmem>>, %arg4: memref<1x128xf32, #tpu.memory_space<vmem>>, %arg5: memref<2x128xf32, #tpu.memory_space<vmem>>) attributes {dimension_semantics = [#tpu.dimension_semantics<parallel>], iteration_bounds = array<i64: 1>, scalar_prefetch = 0 : i64, scratch_operands = 0 : i64, tpu.core_type = #tpu.core_type<tc>, window_params = [{transform_indices = @transform_0, window_bounds = array<i64: 104, 16>}, {pipeline_mode = #tpu.pipeline_mode<synchronous>, transform_indices = @transform_1, window_bounds = array<i64: 8, 128>}, {pipeline_mode = #tpu.pipeline_mode<synchronous>, transform_indices = @transform_2, window_bounds = array<i64: 104, 128>}, {pipeline_mode = #tpu.pipeline_mode<synchronous>, transform_indices = @transform_3, window_bounds = array<i64: 1, 128>}, {transform_indices = @transform_4, window_bounds = array<i64: 2, 128>}]} {
    %c0 = arith.constant 0 : index
    %c0_0 = arith.constant 0 : index
    %0 = vector.load %arg1[%c0, %c0_0] : memref<104x16xf32, #tpu.memory_space<vmem>>, vector<104x16xf32>
    %c0_1 = arith.constant 0 : index
    %c0_2 = arith.constant 0 : index
    %1 = vector.load %arg3[%c0_1, %c0_2] : memref<104x128xf32, #tpu.memory_space<vmem>>, vector<104x128xf32>
    %cst = arith.constant dense<0.000000e+00> : vector<16x128xf32>
    %2 = tpu.matmul %0, %1, %cst {dimension_numbers = #tpu.dot_dimension_numbers<[0], [0], [1], [1], [0, 1, 1, 1], [], []>} : vector<104x16xf32>, vector<104x128xf32>, vector<16x128xf32> -> vector<16x128xf32>
    %3 = vector.shape_cast %2 : vector<16x128xf32> to vector<2x8x128xf32>
    %c0_3 = arith.constant 0 : index
    %c0_4 = arith.constant 0 : index
    %4 = vector.load %arg2[%c0_3, %c0_4] : memref<8x128xf32, #tpu.memory_space<vmem>>, vector<8x128xf32>
    %5 = vector.shape_cast %4 : vector<8x128xf32> to vector<1x8x128xf32>
    %6 = vector.broadcast %5 : vector<1x8x128xf32> to vector<2x8x128xf32>
    %7 = arith.mulf %3, %6 : vector<2x8x128xf32>
    %cst_5 = arith.constant dense<0.000000e+00> : vector<2x128xf32>
    %8 = vector.multi_reduction <add>, %7, %cst_5 [1] : vector<2x8x128xf32> to vector<2x128xf32>
    %c0_6 = arith.constant 0 : index
    %c0_7 = arith.constant 0 : index
    %9 = vector.load %arg4[%c0_6, %c0_7] : memref<1x128xf32, #tpu.memory_space<vmem>>, vector<1x128xf32>
    %10 = vector.broadcast %9 : vector<1x128xf32> to vector<2x128xf32>
    %11 = arith.addf %8, %10 : vector<2x128xf32>
    %c0_8 = arith.constant 0 : index
    %c0_9 = arith.constant 0 : index
    %12 = vector.load %arg5[%c0_8, %c0_9] : memref<2x128xf32, #tpu.memory_space<vmem>>, vector<2x128xf32>
    tpu.vector_store %arg5[%c0_8, %c0_9], %11 {strides = array<i32>} : memref<2x128xf32, #tpu.memory_space<vmem>>, vector<2x128xf32>,
    return
  }
  func.func @transform_0(%arg0: i32) -> (i32, i32) {
    %c0_i32 = arith.constant 0 : i32
    %c0_i32_0 = arith.constant 0 : i32
    return %c0_i32, %arg0 : i32, i32
  }
  func.func @transform_1(%arg0: i32) -> (i32, i32) {
    %c0_i32 = arith.constant 0 : i32
    %c0_i32_0 = arith.constant 0 : i32
    %c0_i32_1 = arith.constant 0 : i32
    return %c0_i32, %c0_i32_0 : i32, i32
  }
  func.func @transform_2(%arg0: i32) -> (i32, i32) {
    %c0_i32 = arith.constant 0 : i32
    %c0_i32_0 = arith.constant 0 : i32
    %c0_i32_1 = arith.constant 0 : i32
    return %c0_i32, %c0_i32_0 : i32, i32
  }
  func.func @transform_3(%arg0: i32) -> (i32, i32) {
    %c0_i32 = arith.constant 0 : i32
    %c0_i32_0 = arith.constant 0 : i32
    %c0_i32_1 = arith.constant 0 : i32
    return %c0_i32, %c0_i32_0 : i32, i32
  }
  func.func @transform_4(%arg0: i32) -> (i32, i32) {
    %c0_i32 = arith.constant 0 : i32
    %c0_i32_0 = arith.constant 0 : i32
    return %arg0, %c0_i32 : i32, i32
  }
}

</mosaic_0001>

<llo_original>
// kernel: tpu_custom_call.1
$region0: #{tpu_custom_call.1}
  #allocation0 [shape = 'u32[]', space=smem, size = 0x4, offset = 0x4, fixed_abs, tag = 'smem constant byte address 0x4 - core index']
  #allocation1 [shape = 'u32[144,128]{1,0:T(1,128)}', space=vmem, size = 0x12000, scoped, tag = 'internal scratch']
  %s0 = inlined_call_operand.vmem [shape: f32[104,16], index: 0, kind: input, shape index: {}]
  %s1 = inlined_call_operand.vmem [shape: f32[8,128], index: 1, kind: input, shape index: {}]
  %s2 = inlined_call_operand.vmem [shape: f32[104,128], index: 2, kind: input, shape index: {}]
  %s3 = inlined_call_operand.vmem [shape: f32[1,128], index: 3, kind: input, shape index: {}]
  %s4 = inlined_call_operand.hbm [shape: f32[2,128], index: 4, kind: output, shape index: {}]
  %s5 = sld [smem:[#allocation0]]
  $region26: #{tpu_custom_call.1} parent=0
    _
  %s7 = ssub.s32 1, %s5
  %s8 = scalar_select 0, %s7, %s5
  $region1: #{tpu_custom_call.1} parent=0
    #allocation2 [shape = 'u8[1024]{0}', space=vmem, size = 0x400, scoped, tag = 'output window, operand 0, single buffered']
    #allocation3 [shape = 's32[1]{0}', space=sflag, size = 0x4, scoped, tag = 'scoped memory for tpu_custom_call.1']
    %9 = vsyncpa [#allocation3], 0
    // Predicated region
    $region2: #{tpu_custom_call.1} parent=1 // pred_check
      _
    $region3: #{tpu_custom_call.1} parent=1 // pred_check_branch
      %11 = sbr.rel (0) target = $region5
    $region4: #{tpu_custom_call.1} parent=1 // pred_region
      _
    $region5: #{tpu_custom_call.1} parent=1 // pred_fallthru
      _
    // Predicated region
    $region6: #{tpu_custom_call.1} parent=1 // pred_check
      _
    $region7: #{tpu_custom_call.1} parent=1 // pred_check_branch
      %13 = sbr.rel (0) target = $region9
    $region8: #{tpu_custom_call.1} parent=1 // pred_region
      _
    $region9: #{tpu_custom_call.1} parent=1 // pred_fallthru
      _
    // Predicated region
    $region10: #{tpu_custom_call.1} parent=1 // pred_check
      _
    $region11: #{tpu_custom_call.1} parent=1 // pred_check_branch
      %15 = sbr.rel (0) target = $region13
    $region12: #{tpu_custom_call.1} parent=1 // pred_region
      _
    $region13: #{tpu_custom_call.1} parent=1 // pred_fallthru
      _
    // Predicated region
    $region14: #{tpu_custom_call.1} parent=1 // pred_check
      _
    $region15: #{tpu_custom_call.1} parent=1 // pred_check_branch
      %17 = sbr.rel (0) target = $region17
    $region16: #{tpu_custom_call.1} parent=1 // pred_region
      _
    $region17: #{tpu_custom_call.1} parent=1 // pred_fallthru
      _
    %v18 = vld [vmem:[%s0] sm:$0xff]
    %v19 = vld [vmem:[%s0 + $0x8] sm:$0xff]
    %v20 = vld [vmem:[%s0 + $0x10] sm:$0xff]
    %v21 = vld [vmem:[%s0 + $0x18] sm:$0xff]
    %v22 = vld [vmem:[%s0 + $0x20] sm:$0xff]
    %v23 = vld [vmem:[%s0 + $0x28] sm:$0xff]
    %v24 = vld [vmem:[%s0 + $0x30] sm:$0xff]
    %v25 = vld [vmem:[%s0 + $0x38] sm:$0xff]
    %v26 = vld [vmem:[%s0 + $0x40] sm:$0xff]
    %v27 = vld [vmem:[%s0 + $0x48] sm:$0xff]
    %v28 = vld [vmem:[%s0 + $0x50] sm:$0xff]
    %v29 = vld [vmem:[%s0 + $0x58] sm:$0xff]
    %v30 = vld [vmem:[%s0 + $0x60] sm:$0xff]
    %v31 = vld [vmem:[%s2] sm:$0xff]
    %v32 = vld [vmem:[%s2 + $0x8] sm:$0xff]
    %v33 = vld [vmem:[%s2 + $0x10] sm:$0xff]
    %v34 = vld [vmem:[%s2 + $0x18] sm:$0xff]
    %v35 = vld [vmem:[%s2 + $0x20] sm:$0xff]
    %v36 = vld [vmem:[%s2 + $0x28] sm:$0xff]
    %v37 = vld [vmem:[%s2 + $0x30] sm:$0xff]
    %v38 = vld [vmem:[%s2 + $0x38] sm:$0xff]
    %v39 = vld [vmem:[%s2 + $0x40] sm:$0xff]
    %v40 = vld [vmem:[%s2 + $0x48] sm:$0xff]
    %v41 = vld [vmem:[%s2 + $0x50] sm:$0xff]
    %v42 = vld [vmem:[%s2 + $0x58] sm:$0xff]
    %v43 = vld [vmem:[%s2 + $0x60] sm:$0xff]
    %44 = vxpose.xlu0.b32.start [1/16] %v18, 128
    %45 = vxpose.xlu0.b32.cont [2/16] %v19, 128
    %46 = vxpose.xlu0.b32.cont [3/16] %v20, 128
    %47 = vxpose.xlu0.b32.cont [4/16] %v21, 128
    %48 = vxpose.xlu0.b32.cont [5/16] %v22, 128
    %49 = vxpose.xlu0.b32.cont [6/16] %v23, 128
    %50 = vxpose.xlu0.b32.cont [7/16] %v24, 128
    %51 = vxpose.xlu0.b32.cont [8/16] %v25, 128
    %52 = vxpose.xlu0.b32.cont [9/16] %v26, 128
    %53 = vxpose.xlu0.b32.cont [10/16] %v27, 128
    %54 = vxpose.xlu0.b32.cont [11/16] %v28, 128
    %55 = vxpose.xlu0.b32.cont [12/16] %v29, 128
    %56 = vxpose.xlu0.b32.cont [13/16] %v30, 128
    %57 = vxpose.xlu0.b32.cont [14/16] 0.0, 128
    %58 = vxpose.xlu0.b32.cont [15/16] 0.0, 128
    %59 = vxpose.xlu0.b32.end [16/16] 0.0, 128
    %v60 = vpop.trf.xlu0
    %v61 = vpop.trf.xlu0
    %v62 = vpop.trf.xlu0
    %v63 = vpop.trf.xlu0
    %v64 = vpop.trf.xlu0
    %v65 = vpop.trf.xlu0
    %v66 = vpop.trf.xlu0
    %v67 = vpop.trf.xlu0
    %v68 = vpop.trf.xlu0
    %v69 = vpop.trf.xlu0
    %v70 = vpop.trf.xlu0
    %v71 = vpop.trf.xlu0
    %v72 = vpop.trf.xlu0
    %v73 = vpop.trf.xlu0
    %v74 = vpop.trf.xlu0
    %v75 = vpop.trf.xlu0
    %vm76 = vcmask 850944
    %v78 = vsel %vm76, %v60, 0
    %v81 = vsel %vm76, %v61, 0
    %83 = vmatprep.subr.mxu0 0.0
    %84 = vmatpush1.msra.mxu0 %v31
    %85 = vmatprep.subr.mxu0 0.0
    %86 = vmatpush1.msra.mxu0 %v32
    %87 = vmatprep.subr.mxu0 0.0
    %88 = vmatpush1.msra.mxu0 %v33
    %89 = vmatprep.subr.mxu0 0.0
    %90 = vmatpush1.msra.mxu0 %v34
    %91 = vmatprep.subr.mxu0 0.0
    %92 = vmatpush1.msra.mxu0 %v35
    %93 = vmatprep.subr.mxu0 0.0
    %94 = vmatpush1.msra.mxu0 %v36
    %95 = vmatprep.subr.mxu0 0.0
    %96 = vmatpush1.msra.mxu0 %v37
    %97 = vmatprep.subr.mxu0 0.0
    %98 = vmatpush1.msra.mxu0 %v38
    %99 = vmatprep.subr.mxu0 0.0
    %100 = vmatpush1.msra.mxu0 %v39
    %101 = vmatprep.subr.mxu0 0.0
    %102 = vmatpush1.msra.mxu0 %v40
    %103 = vmatprep.subr.mxu0 0.0
    %104 = vmatpush1.msra.mxu0 %v41
    %105 = vmatprep.subr.mxu0 0.0
    %106 = vmatpush1.msra.mxu0 %v42
    %107 = vmatprep.subr.mxu0 0.0
    %108 = vmatpush1.msra.mxu0 %v43
    %109 = vmatprep.subr.mxu0 0.0
    %110 = vmatpush1.msra.mxu0 0.0
    %111 = vmatprep.subr.mxu0 0.0
    %112 = vmatpush1.msra.mxu0 0.0
    %113 = vmatprep.subr.mxu0 0.0
    %114 = vmatpush1.msra.mxu0 0.0
    %115 = vmatprep.subr.mxu0 0.0
    %116 = vmatpush1.msra.mxu0 0.0
    %117 = vmatprep.subr.mxu0 0.0
    %118 = vmatpush1.msra.mxu0 0.0
    %119 = vmatprep.subr.mxu0 0.0
    %120 = vmatpush1.msra.mxu0 0.0
    %121 = vmatprep.subr.mxu0 0.0
    %122 = vmatpush1.msra.mxu0 0.0
    %123 = vmatprep.subr.mxu0 0.0
    %124 = vmatpush1.msra.mxu0 0.0
    %125 = vmatprep.subr.mxu0 0.0
    %126 = vmatpush1.msra.mxu0 0.0
    %127 = vmatprep.subr.mxu0 0.0
    %128 = vmatpush1.msra.mxu0 0.0
    %129 = vmatprep.subr.mxu0 0.0
    %130 = vmatpush1.msra.mxu0 0.0
    %131 = vmatprep.subr.mxu0 0.0
    %132 = vmatpush1.msra.mxu0 0.0
    %133 = vmatprep.subr.mxu0 0.0
    %134 = vmatpush1.msra.mxu0 0.0
    %135 = vmatprep.subr.mxu0 0.0
    %136 = vmatpush1.msra.mxu0 0.0
    %137 = vmatprep.subr.mxu0 0.0
    %138 = vmatpush1.msra.mxu0 0.0
    %139 = vmatprep.subr.mxu0 0.0
    %140 = vmatpush1.msra.mxu0 0.0
    %141 = vmatprep.subr.mxu0 0.0
    %142 = vmatpush1.msra.mxu0 0.0
    %143 = vmatprep.subr.mxu0 0.0
    %144 = vmatpush1.msra.mxu0 0.0
    %145 = vmatprep.subr.mxu0 0.0
    %146 = vmatpush1.msra.mxu0 0.0
    %147 = vmatprep.mubr.f32.mxu0 0.0
    %148 = vmatmul.mubr.f32.gmra.mrb[0].mxu0 %v78
    %v149 = vpop.f32.mrb[0].mxu0
    %v150 = vadd.f32 0.0, %v149
    %v151 = vpop.f32.mrb[0].mxu0
    %152 = vmatprep.mubr.f32.mxu0 0.0
    %153 = vmatmul.mubr.f32.gmra.mrb[0].mxu0 %v81
    %v154 = vpop.f32.mrb[0].mxu0
    %v155 = vadd.f32 0.0, %v154
    %v156 = vpop.f32.mrb[0].mxu0
    %157 = vdwg.mxu0
    %v158 = vld [vmem:[%s1] sm:$0xff]
    %v159 = vmul.f32 %v150, %v158
    %v160 = vmul.f32 %v155, %v158
    %v161 = vrot.slane %v159, 4
    %v162 = vadd.f32 %v159, %v161
    %v163 = vrot.slane %v162, 2
    %v164 = vadd.f32 %v162, %v163
    %v165 = vrot.slane %v164, 1
    %v166 = vadd.f32 %v164, %v165
    %v167 = vrot.slane %v160, 4
    %v168 = vadd.f32 %v160, %v167
    %v169 = vrot.slane %v168, 2
    %v170 = vadd.f32 %v168, %v169
    %v171 = vrot.slane %v170, 1
    %v172 = vadd.f32 %v170, %v171
    %v173 = vld [vmem:[%s3] sm:$0x1]
    %v175 = vlaneseq
    %v176 = vshrl.u32 %v175, 7
    %v177 = vsub.s32 0, %v176
    %v178 = vrot.slane %v173, %v177
    %v180 = vadd.f32 %v166, %v178
    %v181 = vadd.f32 %v172, %v178
    %v184 = vrot.slane %v181, 7
    %vm185 = vcmask 1041409
    %v186 = vsel %vm185, %v184, %v180
    %188 = vst [vmem:[#allocation2] sm:$0x3] %v186
    // Predicated region
    $region18: #{tpu_custom_call.1} parent=1 // pred_check
      _
    $region19: #{tpu_custom_call.1} parent=1 // pred_check_branch
      %190 = sbr.rel (0) target = $region21
    $region20: #{tpu_custom_call.1} parent=1 // pred_region
      %s192 = ssub.s32 32, 32
      %193 = vsyncadd [#allocation3], %s192
      %s195 = sshll.u32 [#allocation2], 4
      %s196 = int_to_ptr.vmem [resolvable:$true] %s195
      %198 = dma.vmem_to_hbm [thread:$0]  %s196, 32, %s4, [#allocation3]
    $region21: #{tpu_custom_call.1} parent=1 // pred_fallthru
      _
    // Predicated region
    $region22: #{tpu_custom_call.1} parent=1 // pred_check
      _
    $region23: #{tpu_custom_call.1} parent=1 // pred_check_branch
      %200 = sbr.rel (0) target = $region25
    $region24: #{tpu_custom_call.1} parent=1 // pred_region
      %201 = dma.done [#allocation3], 32
    $region25: #{tpu_custom_call.1} parent=1 // pred_fallthru
      _
    %202 = vsyncpa [#allocation3], 1

</llo_original>
